<compile_context>
chip_gen: v7x
topology: tpu7x:2x2x1
jax: 0.10.0
libtpu: 0.0.40
codegen_flags: <defaults>
</compile_context>

<pallas_src>
import functools

import jax
import jax.numpy as jnp
from jax.experimental import pallas as pl
from jax.experimental.pallas import tpu as pltpu


def _round_up(n, m):
    return ((n + m - 1) // m) * m


def _pick_tm(batch, block_m):
    """Sublane-aligned batch tile sized with lane-padded VMEM accounting.

    Lane padding to 128: the x (tm, S) and mean (tm, A) blocks each cost
    ~512 B/row of VMEM (double-buffered -> ~2 KB/row) plus ~0.5 KB/row each
    for the h1/h2 f32 temporaries -> ~3 KB/row total.  block_m=4096 ~ 12 MB,
    which fits v5e's 16 MiB and v6e/v7x's 32 MiB default scoped VMEM.
    On v6e, block_m up to ~8192 is fine (sweep); on v5e keep <= 4096 unless
    vmem_limit_bytes is raised.
    """
    tm = min(block_m, _round_up(batch, 8))
    # Guarantee an even, >=2 step grid on mid/large batches so the "parallel"
    # batch axis can actually be split across v7x's two TensorCores.
    if batch > 2048:
        steps = max(2, pl.cdiv(batch, tm))
        if steps % 2:
            steps += 1
        tm = _round_up(pl.cdiv(batch, steps), 8)
    return max(tm, 8)


def _policy_kernel(x_ref, w1_ref, b1_ref, w2_ref, b2_ref, w3_ref, b3_ref,
                   mean_ref, *, activation_dtype):
    # x tile: (tm, state_space) f32.  Weights/biases are VMEM-resident across
    # grid steps (constant index_maps); no per-step casts on them.
    x = x_ref[...]

    # fc1 + tanh.  MXU accumulates in f32; tanh runs at activation_dtype on
    # the EUP (bf16 is ~2x the f32 rate on v6e/v7x; keep f32 on v5e).
    a1 = jnp.dot(x, w1_ref[...], preferred_element_type=jnp.float32) + b1_ref[...]
    h1 = jnp.tanh(a1.astype(activation_dtype))

    # fc2 + tanh.  If activation_dtype is bf16, w2/w3 were cast bf16 in the
    # wrapper so the bf16 activations feed the MXU without re-promotion.
    a2 = jnp.dot(h1, w2_ref[...], preferred_element_type=jnp.float32) + b2_ref[...]
    h2 = jnp.tanh(a2.astype(activation_dtype))

    # fc3 (action mean, no activation), stored f32.
    mean_ref[...] = (
        jnp.dot(h2, w3_ref[...], preferred_element_type=jnp.float32) + b3_ref[...]
    ).astype(mean_ref.dtype)


def policy_forward(x, w1, b1, w2, b2, w3, b3, sigma_param, *,
                   block_m=4096, activation_dtype=jnp.float32,
                   min_pallas_batch=0):
    """Actor MLP forward.  Returns (action_mean, sigma) of the Normal policy.

    block_m:           batch tile upper bound (v5e: <=4096; v6e: 4096-8192;
                       v7x: default fine, lane-padded footprint stays well
                       under the 32 MiB scoped limit).
    activation_dtype:  jnp.float32 (default, matches torch) or jnp.bfloat16
                       (recommended on v6e/v7x at large batch; small precision
                       tradeoff). Keep f32 on v5e (no bf16 VPU/EUP).
    min_pallas_batch:  below this batch size, use plain XLA (the kernel is
                       launch/DMA-overhead bound for a handful of rows).
    """
    batch, state_space = x.shape
    hidden = w1.shape[1]
    action_space = w3.shape[1]

    # sigma is independent of x: stable softplus in plain JAX, torch-shaped.
    sigma = jax.nn.softplus(jnp.asarray(sigma_param, jnp.float32).reshape(-1))

    if batch < min_pallas_batch:
        # Overhead-dominated regime; plain XLA is the right tool.
        h1 = jnp.tanh(x @ w1 + b1)
        h2 = jnp.tanh(h1 @ w2 + b2)
        return h2 @ w3 + b3, sigma

    # bf16 path: downcast the VMEM-resident w2/w3 once here, not every grid
    # step inside the kernel.  w1 stays f32 (x is f32); biases stay f32.
    if jnp.dtype(activation_dtype) != jnp.dtype(jnp.float32):
        w2 = w2.astype(activation_dtype)
        w3 = w3.astype(activation_dtype)

    tm = _pick_tm(batch, block_m)
    grid = (pl.cdiv(batch, tm),)   # ragged final block: Pallas masks its store

    kernel = functools.partial(_policy_kernel, activation_dtype=activation_dtype)

    mean = pl.pallas_call(
        kernel,
        out_shape=jax.ShapeDtypeStruct((batch, action_space), jnp.float32),
        grid_spec=pltpu.PrefetchScalarGridSpec(
            num_scalar_prefetch=0,
            grid=grid,
            in_specs=[
                # x: tiled over batch, double-buffered HBM->VMEM DMA.
                pl.BlockSpec((tm, state_space), lambda i: (i, 0)),
                # Weights / biases: full arrays, VMEM-resident across steps.
                pl.BlockSpec((state_space, hidden), lambda i: (0, 0)),
                pl.BlockSpec((1, hidden), lambda i: (0, 0)),
                pl.BlockSpec((hidden, hidden), lambda i: (0, 0)),
                pl.BlockSpec((1, hidden), lambda i: (0, 0)),
                pl.BlockSpec((hidden, action_space), lambda i: (0, 0)),
                pl.BlockSpec((1, action_space), lambda i: (0, 0)),
            ],
            out_specs=pl.BlockSpec((tm, action_space), lambda i: (i, 0)),
        ),
        compiler_params=pltpu.CompilerParams(
            dimension_semantics=("parallel",),
        ),
    )(x, w1, b1, w2, b2, w3, b3)

    # TODO(synk): second-order follow-up if profiling shows vst binding after
    # the tanh fix: emit a lane-dense (rows//32, 128) mean slab instead of the
    # 4-lane-wide output (only worth the in-kernel XLU relayout if stores bind).
    return mean, sigma


def init_policy_params(key, state_space, action_space, hidden=64):
    """Mirrors Policy.init_weights(): weights ~ N(0,1), biases 0, sigma 0.5."""
    k1, k2, k3 = jax.random.split(key, 3)
    w1 = jax.random.normal(k1, (state_space, hidden), dtype=jnp.float32)
    b1 = jnp.zeros((1, hidden), dtype=jnp.float32)
    w2 = jax.random.normal(k2, (hidden, hidden), dtype=jnp.float32)
    b2 = jnp.zeros((1, hidden), dtype=jnp.float32)
    w3 = jax.random.normal(k3, (hidden, action_space), dtype=jnp.float32)
    b3 = jnp.zeros((1, action_space), dtype=jnp.float32)
    sigma_param = jnp.full((action_space,), 0.5, dtype=jnp.float32)
    return w1, b1, w2, b2, w3, b3, sigma_param


if __name__ == "__main__":
    key = jax.random.PRNGKey(0)
    k_params, k_x = jax.random.split(key)

    batch = 2
    state_space = 8
    action_space = 4
    hidden = 64

    params = init_policy_params(k_params, state_space, action_space, hidden)
    x = jax.random.normal(k_x, (batch, state_space), dtype=jnp.float32)

    mean, sigma = policy_forward(x, *params)
    jax.block_until_ready((mean, sigma))

    # Pure-JAX reference check of the same math.
    w1, b1, w2, b2, w3, b3, sp = params
    h1 = jnp.tanh(x @ w1 + b1)
    h2 = jnp.tanh(h1 @ w2 + b2)
    mean_ref = h2 @ w3 + b3
    sigma_ref = jax.nn.softplus(sp)
    assert mean.shape == (batch, action_space)
    assert sigma.shape == (action_space,)
    assert jnp.allclose(mean, mean_ref, atol=1e-4, rtol=1e-4)
    assert jnp.allclose(sigma, sigma_ref, atol=1e-5, rtol=1e-5)

    # NOTE: the torch module returns Normal(mean, sigma); (mean, sigma) fully
    # characterizes that distribution (sampling/log_prob can be done in JAX).
    print("KERNEL_OK")
</pallas_src>

<mosaic_0001>
module attributes {stable_mosaic.version = 11 : i64} {
  func.func @_policy_kernel(%arg0: i32, %arg1: memref<8x8xf32, #tpu.memory_space<vmem>>, %arg2: memref<8x64xf32, #tpu.memory_space<vmem>>, %arg3: memref<1x64xf32, #tpu.memory_space<vmem>>, %arg4: memref<64x64xf32, #tpu.memory_space<vmem>>, %arg5: memref<1x64xf32, #tpu.memory_space<vmem>>, %arg6: memref<64x4xf32, #tpu.memory_space<vmem>>, %arg7: memref<1x4xf32, #tpu.memory_space<vmem>>, %arg8: memref<8x4xf32, #tpu.memory_space<vmem>>) attributes {dimension_semantics = [#tpu.dimension_semantics<parallel>], iteration_bounds = array<i64: 1>, scalar_prefetch = 0 : i64, scratch_operands = 0 : i64, tpu.core_type = #tpu.core_type<tc>, window_params = [{transform_indices = @transform_0, window_bounds = array<i64: 8, 8>}, {pipeline_mode = #tpu.pipeline_mode<synchronous>, transform_indices = @transform_1, window_bounds = array<i64: 8, 64>}, {pipeline_mode = #tpu.pipeline_mode<synchronous>, transform_indices = @transform_2, window_bounds = array<i64: 1, 64>}, {pipeline_mode = #tpu.pipeline_mode<synchronous>, transform_indices = @transform_3, window_bounds = array<i64: 64, 64>}, {pipeline_mode = #tpu.pipeline_mode<synchronous>, transform_indices = @transform_4, window_bounds = array<i64: 1, 64>}, {pipeline_mode = #tpu.pipeline_mode<synchronous>, transform_indices = @transform_5, window_bounds = array<i64: 64, 4>}, {pipeline_mode = #tpu.pipeline_mode<synchronous>, transform_indices = @transform_6, window_bounds = array<i64: 1, 4>}, {transform_indices = @transform_7, window_bounds = array<i64: 8, 4>}]} {
    %c0 = arith.constant 0 : index
    %c0_0 = arith.constant 0 : index
    %0 = vector.load %arg1[%c0, %c0_0] : memref<8x8xf32, #tpu.memory_space<vmem>>, vector<8x8xf32>
    %c0_1 = arith.constant 0 : index
    %c0_2 = arith.constant 0 : index
    %1 = vector.load %arg2[%c0_1, %c0_2] : memref<8x64xf32, #tpu.memory_space<vmem>>, vector<8x64xf32>
    %cst = arith.constant dense<0.000000e+00> : vector<8x64xf32>
    %2 = tpu.matmul %0, %1, %cst {dimension_numbers = #tpu.dot_dimension_numbers<[1], [0], [0], [1], [0, 0, 1, 1], [], []>} : vector<8x8xf32>, vector<8x64xf32>, vector<8x64xf32> -> vector<8x64xf32>
    %c0_3 = arith.constant 0 : index
    %c0_4 = arith.constant 0 : index
    %3 = vector.load %arg3[%c0_3, %c0_4] : memref<1x64xf32, #tpu.memory_space<vmem>>, vector<1x64xf32>
    %4 = vector.broadcast %3 : vector<1x64xf32> to vector<8x64xf32>
    %5 = arith.addf %2, %4 : vector<8x64xf32>
    %6 = math.tanh %5 : vector<8x64xf32>
    %c0_5 = arith.constant 0 : index
    %c0_6 = arith.constant 0 : index
    %7 = vector.load %arg4[%c0_5, %c0_6] : memref<64x64xf32, #tpu.memory_space<vmem>>, vector<64x64xf32>
    %cst_7 = arith.constant dense<0.000000e+00> : vector<8x64xf32>
    %8 = tpu.matmul %6, %7, %cst_7 {dimension_numbers = #tpu.dot_dimension_numbers<[1], [0], [0], [1], [0, 0, 1, 1], [], []>} : vector<8x64xf32>, vector<64x64xf32>, vector<8x64xf32> -> vector<8x64xf32>
    %c0_8 = arith.constant 0 : index
    %c0_9 = arith.constant 0 : index
    %9 = vector.load %arg5[%c0_8, %c0_9] : memref<1x64xf32, #tpu.memory_space<vmem>>, vector<1x64xf32>
    %10 = vector.broadcast %9 : vector<1x64xf32> to vector<8x64xf32>
    %11 = arith.addf %8, %10 : vector<8x64xf32>
    %12 = math.tanh %11 : vector<8x64xf32>
    %c0_10 = arith.constant 0 : index
    %c0_11 = arith.constant 0 : index
    %13 = vector.load %arg6[%c0_10, %c0_11] : memref<64x4xf32, #tpu.memory_space<vmem>>, vector<64x4xf32>
    %cst_12 = arith.constant dense<0.000000e+00> : vector<8x4xf32>
    %14 = tpu.matmul %12, %13, %cst_12 {dimension_numbers = #tpu.dot_dimension_numbers<[1], [0], [0], [1], [0, 0, 1, 1], [], []>} : vector<8x64xf32>, vector<64x4xf32>, vector<8x4xf32> -> vector<8x4xf32>
    %c0_13 = arith.constant 0 : index
    %c0_14 = arith.constant 0 : index
    %15 = vector.load %arg7[%c0_13, %c0_14] : memref<1x4xf32, #tpu.memory_space<vmem>>, vector<1x4xf32>
    %16 = vector.broadcast %15 : vector<1x4xf32> to vector<8x4xf32>
    %17 = arith.addf %14, %16 : vector<8x4xf32>
    %c0_15 = arith.constant 0 : index
    %c0_16 = arith.constant 0 : index
    %18 = vector.load %arg8[%c0_15, %c0_16] : memref<8x4xf32, #tpu.memory_space<vmem>>, vector<8x4xf32>
    tpu.vector_store %arg8[%c0_15, %c0_16], %17 {strides = array<i32>} : memref<8x4xf32, #tpu.memory_space<vmem>>, vector<8x4xf32>,
    return
  }
  func.func @transform_0(%arg0: i32) -> (i32, i32) {
    %c0_i32 = arith.constant 0 : i32
    %c0_i32_0 = arith.constant 0 : i32
    return %arg0, %c0_i32 : i32, i32
  }
  func.func @transform_1(%arg0: i32) -> (i32, i32) {
    %c0_i32 = arith.constant 0 : i32
    %c0_i32_0 = arith.constant 0 : i32
    %c0_i32_1 = arith.constant 0 : i32
    return %c0_i32, %c0_i32_0 : i32, i32
  }
  func.func @transform_2(%arg0: i32) -> (i32, i32) {
    %c0_i32 = arith.constant 0 : i32
    %c0_i32_0 = arith.constant 0 : i32
    %c0_i32_1 = arith.constant 0 : i32
    return %c0_i32, %c0_i32_0 : i32, i32
  }
  func.func @transform_3(%arg0: i32) -> (i32, i32) {
    %c0_i32 = arith.constant 0 : i32
    %c0_i32_0 = arith.constant 0 : i32
    %c0_i32_1 = arith.constant 0 : i32
    return %c0_i32, %c0_i32_0 : i32, i32
  }
  func.func @transform_4(%arg0: i32) -> (i32, i32) {
    %c0_i32 = arith.constant 0 : i32
    %c0_i32_0 = arith.constant 0 : i32
    %c0_i32_1 = arith.constant 0 : i32
    return %c0_i32, %c0_i32_0 : i32, i32
  }
  func.func @transform_5(%arg0: i32) -> (i32, i32) {
    %c0_i32 = arith.constant 0 : i32
    %c0_i32_0 = arith.constant 0 : i32
    %c0_i32_1 = arith.constant 0 : i32
    return %c0_i32, %c0_i32_0 : i32, i32
  }
  func.func @transform_6(%arg0: i32) -> (i32, i32) {
    %c0_i32 = arith.constant 0 : i32
    %c0_i32_0 = arith.constant 0 : i32
    %c0_i32_1 = arith.constant 0 : i32
    return %c0_i32, %c0_i32_0 : i32, i32
  }
  func.func @transform_7(%arg0: i32) -> (i32, i32) {
    %c0_i32 = arith.constant 0 : i32
    %c0_i32_0 = arith.constant 0 : i32
    return %arg0, %c0_i32 : i32, i32
  }
}

</mosaic_0001>

<llo_original>
// kernel: tpu_custom_call.1
$region0: #{tpu_custom_call.1}
  #allocation0 [shape = 'u32[]', space=smem, size = 0x4, offset = 0x4, fixed_abs, tag = 'smem constant byte address 0x4 - core index']
  #allocation1 [shape = 'u32[144,128]{1,0:T(1,128)}', space=vmem, size = 0x12000, scoped, tag = 'internal scratch']
  %s0 = inlined_call_operand.vmem [shape: f32[2,8], index: 0, kind: input, shape index: {}]
  %s1 = inlined_call_operand.vmem [shape: f32[8,64], index: 1, kind: input, shape index: {}]
  %s2 = inlined_call_operand.vmem [shape: f32[1,64], index: 2, kind: input, shape index: {}]
  %s3 = inlined_call_operand.vmem [shape: f32[64,64], index: 3, kind: input, shape index: {}]
  %s4 = inlined_call_operand.vmem [shape: f32[1,64], index: 4, kind: input, shape index: {}]
  %s5 = inlined_call_operand.vmem [shape: f32[64,4], index: 5, kind: input, shape index: {}]
  %s6 = inlined_call_operand.vmem [shape: f32[1,4], index: 6, kind: input, shape index: {}]
  %s7 = inlined_call_operand.hbm [shape: f32[2,4], index: 7, kind: output, shape index: {}]
  %s8 = sld [smem:[#allocation0]]
  $region38: #{tpu_custom_call.1} parent=0
    _
  %s10 = ssub.s32 1, %s8
  %s11 = scalar_select 0, %s10, %s8
  $region1: #{tpu_custom_call.1} parent=0
    #allocation2 [shape = 'u8[4096]{0}', space=vmem, size = 0x1000, scoped, tag = 'output window, operand 0, single buffered']
    #allocation3 [shape = 's32[1]{0}', space=sflag, size = 0x4, scoped, tag = 'scoped memory for tpu_custom_call.1']
    %12 = vsyncpa [#allocation3], 0
    // Predicated region
    $region2: #{tpu_custom_call.1} parent=1 // pred_check
      _
    $region3: #{tpu_custom_call.1} parent=1 // pred_check_branch
      %14 = sbr.rel (0) target = $region5
    $region4: #{tpu_custom_call.1} parent=1 // pred_region
      _
    $region5: #{tpu_custom_call.1} parent=1 // pred_fallthru
      _
    // Predicated region
    $region6: #{tpu_custom_call.1} parent=1 // pred_check
      _
    $region7: #{tpu_custom_call.1} parent=1 // pred_check_branch
      %16 = sbr.rel (0) target = $region9
    $region8: #{tpu_custom_call.1} parent=1 // pred_region
      _
    $region9: #{tpu_custom_call.1} parent=1 // pred_fallthru
      _
    // Predicated region
    $region10: #{tpu_custom_call.1} parent=1 // pred_check
      _
    $region11: #{tpu_custom_call.1} parent=1 // pred_check_branch
      %18 = sbr.rel (0) target = $region13
    $region12: #{tpu_custom_call.1} parent=1 // pred_region
      _
    $region13: #{tpu_custom_call.1} parent=1 // pred_fallthru
      _
    // Predicated region
    $region14: #{tpu_custom_call.1} parent=1 // pred_check
      _
    $region15: #{tpu_custom_call.1} parent=1 // pred_check_branch
      %20 = sbr.rel (0) target = $region17
    $region16: #{tpu_custom_call.1} parent=1 // pred_region
      _
    $region17: #{tpu_custom_call.1} parent=1 // pred_fallthru
      _
    // Predicated region
    $region18: #{tpu_custom_call.1} parent=1 // pred_check
      _
    $region19: #{tpu_custom_call.1} parent=1 // pred_check_branch
      %22 = sbr.rel (0) target = $region21
    $region20: #{tpu_custom_call.1} parent=1 // pred_region
      _
    $region21: #{tpu_custom_call.1} parent=1 // pred_fallthru
      _
    // Predicated region
    $region22: #{tpu_custom_call.1} parent=1 // pred_check
      _
    $region23: #{tpu_custom_call.1} parent=1 // pred_check_branch
      %24 = sbr.rel (0) target = $region25
    $region24: #{tpu_custom_call.1} parent=1 // pred_region
      _
    $region25: #{tpu_custom_call.1} parent=1 // pred_fallthru
      _
    // Predicated region
    $region26: #{tpu_custom_call.1} parent=1 // pred_check
      _
    $region27: #{tpu_custom_call.1} parent=1 // pred_check_branch
      %26 = sbr.rel (0) target = $region29
    $region28: #{tpu_custom_call.1} parent=1 // pred_region
      _
    $region29: #{tpu_custom_call.1} parent=1 // pred_fallthru
      _
    %v27 = vld [vmem:[%s0] sm:$0xff]
    %v28 = vld [vmem:[%s1] sm:$0xff]
    %v29 = vld [vmem:[%s2] sm:$0x1]
    %v31 = vlaneseq
    %v32 = vshrl.u32 %v31, 7
    %v33 = vsub.s32 0, %v32
    %v34 = vrot.slane %v29, %v33
    %vm36 = vcmask 64512
    %v38 = vsel %vm36, %v27, 0
    %40 = vmatprep.subr.mxu0 0.0
    %41 = vmatpush1.msra.mxu0 %v28
    %42 = vmatprep.subr.mxu0 0.0
    %43 = vmatpush1.msra.mxu0 0.0
    %44 = vmatprep.subr.mxu0 0.0
    %45 = vmatpush1.msra.mxu0 0.0
    %46 = vmatprep.subr.mxu0 0.0
    %47 = vmatpush1.msra.mxu0 0.0
    %48 = vmatprep.subr.mxu0 0.0
    %49 = vmatpush1.msra.mxu0 0.0
    %50 = vmatprep.subr.mxu0 0.0
    %51 = vmatpush1.msra.mxu0 0.0
    %52 = vmatprep.subr.mxu0 0.0
    %53 = vmatpush1.msra.mxu0 0.0
    %54 = vmatprep.subr.mxu0 0.0
    %55 = vmatpush1.msra.mxu0 0.0
    %56 = vmatprep.subr.mxu0 0.0
    %57 = vmatpush1.msra.mxu0 0.0
    %58 = vmatprep.subr.mxu0 0.0
    %59 = vmatpush1.msra.mxu0 0.0
    %60 = vmatprep.subr.mxu0 0.0
    %61 = vmatpush1.msra.mxu0 0.0
    %62 = vmatprep.subr.mxu0 0.0
    %63 = vmatpush1.msra.mxu0 0.0
    %64 = vmatprep.subr.mxu0 0.0
    %65 = vmatpush1.msra.mxu0 0.0
    %66 = vmatprep.subr.mxu0 0.0
    %67 = vmatpush1.msra.mxu0 0.0
    %68 = vmatprep.subr.mxu0 0.0
    %69 = vmatpush1.msra.mxu0 0.0
    %70 = vmatprep.subr.mxu0 0.0
    %71 = vmatpush1.msra.mxu0 0.0
    %72 = vmatprep.subr.mxu0 0.0
    %73 = vmatpush1.msra.mxu0 0.0
    %74 = vmatprep.subr.mxu0 0.0
    %75 = vmatpush1.msra.mxu0 0.0
    %76 = vmatprep.subr.mxu0 0.0
    %77 = vmatpush1.msra.mxu0 0.0
    %78 = vmatprep.subr.mxu0 0.0
    %79 = vmatpush1.msra.mxu0 0.0
    %80 = vmatprep.subr.mxu0 0.0
    %81 = vmatpush1.msra.mxu0 0.0
    %82 = vmatprep.subr.mxu0 0.0
    %83 = vmatpush1.msra.mxu0 0.0
    %84 = vmatprep.subr.mxu0 0.0
    %85 = vmatpush1.msra.mxu0 0.0
    %86 = vmatprep.subr.mxu0 0.0
    %87 = vmatpush1.msra.mxu0 0.0
    %88 = vmatprep.subr.mxu0 0.0
    %89 = vmatpush1.msra.mxu0 0.0
    %90 = vmatprep.subr.mxu0 0.0
    %91 = vmatpush1.msra.mxu0 0.0
    %92 = vmatprep.subr.mxu0 0.0
    %93 = vmatpush1.msra.mxu0 0.0
    %94 = vmatprep.subr.mxu0 0.0
    %95 = vmatpush1.msra.mxu0 0.0
    %96 = vmatprep.subr.mxu0 0.0
    %97 = vmatpush1.msra.mxu0 0.0
    %98 = vmatprep.subr.mxu0 0.0
    %99 = vmatpush1.msra.mxu0 0.0
    %100 = vmatprep.subr.mxu0 0.0
    %101 = vmatpush1.msra.mxu0 0.0
    %102 = vmatprep.subr.mxu0 0.0
    %103 = vmatpush1.msra.mxu0 0.0
    %104 = vmatprep.mubr.f32.mxu0 0.0
    %105 = vmatmul.mubr.f32.gmra.mrb[0].mxu0 %v38
    %v106 = vpop.f32.mrb[0].mxu0
    %v107 = vadd.f32 %v34, %v106
    %v108 = vpop.f32.mrb[0].mxu0
    %109 = vdwg.mxu0
    %v110 = vtanh.pop %v107
    %v111 = vld [vmem:[%s3] sm:$0xff]
    %v112 = vld [vmem:[%s3 + $0x8] sm:$0xff]
    %v113 = vld [vmem:[%s3 + $0x10] sm:$0xff]
    %v114 = vld [vmem:[%s3 + $0x18] sm:$0xff]
    %v115 = vld [vmem:[%s3 + $0x20] sm:$0xff]
    %v116 = vld [vmem:[%s3 + $0x28] sm:$0xff]
    %v117 = vld [vmem:[%s3 + $0x30] sm:$0xff]
    %v118 = vld [vmem:[%s3 + $0x38] sm:$0xff]
    %v119 = vld [vmem:[%s4] sm:$0x1]
    %v121 = vlaneseq
    %v122 = vshrl.u32 %v121, 7
    %v123 = vsub.s32 0, %v122
    %v124 = vrot.slane %v119, %v123
    %vm126 = vcmask 523264
    %v128 = vsel %vm126, %v110, 0
    %130 = vmatprep.subr.mxu0 0.0
    %131 = vmatpush1.msra.mxu0 %v111
    %132 = vmatprep.subr.mxu0 0.0
    %133 = vmatpush1.msra.mxu0 %v112
    %134 = vmatprep.subr.mxu0 0.0
    %135 = vmatpush1.msra.mxu0 %v113
    %136 = vmatprep.subr.mxu0 0.0
    %137 = vmatpush1.msra.mxu0 %v114
    %138 = vmatprep.subr.mxu0 0.0
    %139 = vmatpush1.msra.mxu0 %v115
    %140 = vmatprep.subr.mxu0 0.0
    %141 = vmatpush1.msra.mxu0 %v116
    %142 = vmatprep.subr.mxu0 0.0
    %143 = vmatpush1.msra.mxu0 %v117
    %144 = vmatprep.subr.mxu0 0.0
    %145 = vmatpush1.msra.mxu0 %v118
    %146 = vmatprep.subr.mxu0 0.0
    %147 = vmatpush1.msra.mxu0 0.0
    %148 = vmatprep.subr.mxu0 0.0
    %149 = vmatpush1.msra.mxu0 0.0
    %150 = vmatprep.subr.mxu0 0.0
    %151 = vmatpush1.msra.mxu0 0.0
    %152 = vmatprep.subr.mxu0 0.0
    %153 = vmatpush1.msra.mxu0 0.0
    %154 = vmatprep.subr.mxu0 0.0
    %155 = vmatpush1.msra.mxu0 0.0
    %156 = vmatprep.subr.mxu0 0.0
    %157 = vmatpush1.msra.mxu0 0.0
    %158 = vmatprep.subr.mxu0 0.0
    %159 = vmatpush1.msra.mxu0 0.0
    %160 = vmatprep.subr.mxu0 0.0
    %161 = vmatpush1.msra.mxu0 0.0
    %162 = vmatprep.subr.mxu0 0.0
    %163 = vmatpush1.msra.mxu0 0.0
    %164 = vmatprep.subr.mxu0 0.0
    %165 = vmatpush1.msra.mxu0 0.0
    %166 = vmatprep.subr.mxu0 0.0
    %167 = vmatpush1.msra.mxu0 0.0
    %168 = vmatprep.subr.mxu0 0.0
    %169 = vmatpush1.msra.mxu0 0.0
    %170 = vmatprep.subr.mxu0 0.0
    %171 = vmatpush1.msra.mxu0 0.0
    %172 = vmatprep.subr.mxu0 0.0
    %173 = vmatpush1.msra.mxu0 0.0
    %174 = vmatprep.subr.mxu0 0.0
    %175 = vmatpush1.msra.mxu0 0.0
    %176 = vmatprep.subr.mxu0 0.0
    %177 = vmatpush1.msra.mxu0 0.0
    %178 = vmatprep.subr.mxu0 0.0
    %179 = vmatpush1.msra.mxu0 0.0
    %180 = vmatprep.subr.mxu0 0.0
    %181 = vmatpush1.msra.mxu0 0.0
    %182 = vmatprep.subr.mxu0 0.0
    %183 = vmatpush1.msra.mxu0 0.0
    %184 = vmatprep.subr.mxu0 0.0
    %185 = vmatpush1.msra.mxu0 0.0
    %186 = vmatprep.subr.mxu0 0.0
    %187 = vmatpush1.msra.mxu0 0.0
    %188 = vmatprep.subr.mxu0 0.0
    %189 = vmatpush1.msra.mxu0 0.0
    %190 = vmatprep.subr.mxu0 0.0
    %191 = vmatpush1.msra.mxu0 0.0
    %192 = vmatprep.subr.mxu0 0.0
    %193 = vmatpush1.msra.mxu0 0.0
    %194 = vmatprep.mubr.f32.mxu0 0.0
    %195 = vmatmul.mubr.f32.gmra.mrb[0].mxu0 %v128
    %v196 = vpop.f32.mrb[0].mxu0
    %v197 = vadd.f32 %v124, %v196
    %v198 = vpop.f32.mrb[0].mxu0
    %199 = vdwg.mxu0
    %v200 = vtanh.pop %v197
    %v201 = vld [vmem:[%s5] sm:$0xff]
    %v202 = vld [vmem:[%s5 + $0x8] sm:$0xff]
    %v203 = vld [vmem:[%s5 + $0x10] sm:$0xff]
    %v204 = vld [vmem:[%s5 + $0x18] sm:$0xff]
    %v205 = vld [vmem:[%s5 + $0x20] sm:$0xff]
    %v206 = vld [vmem:[%s5 + $0x28] sm:$0xff]
    %v207 = vld [vmem:[%s5 + $0x30] sm:$0xff]
    %v208 = vld [vmem:[%s5 + $0x38] sm:$0xff]
    %v209 = vld [vmem:[%s6] sm:$0x1]
    %v211 = vlaneseq
    %v212 = vshrl.u32 %v211, 7
    %v213 = vsub.s32 0, %v212
    %v214 = vrot.slane %v209, %v213
    %v217 = vsel %vm126, %v200, 0
    %219 = vmatprep.subr.mxu0 0.0
    %220 = vmatpush1.msra.mxu0 %v201
    %221 = vmatprep.subr.mxu0 0.0
    %222 = vmatpush1.msra.mxu0 %v202
    %223 = vmatprep.subr.mxu0 0.0
    %224 = vmatpush1.msra.mxu0 %v203
    %225 = vmatprep.subr.mxu0 0.0
    %226 = vmatpush1.msra.mxu0 %v204
    %227 = vmatprep.subr.mxu0 0.0
    %228 = vmatpush1.msra.mxu0 %v205
    %229 = vmatprep.subr.mxu0 0.0
    %230 = vmatpush1.msra.mxu0 %v206
    %231 = vmatprep.subr.mxu0 0.0
    %232 = vmatpush1.msra.mxu0 %v207
    %233 = vmatprep.subr.mxu0 0.0
    %234 = vmatpush1.msra.mxu0 %v208
    %235 = vmatprep.subr.mxu0 0.0
    %236 = vmatpush1.msra.mxu0 0.0
    %237 = vmatprep.subr.mxu0 0.0
    %238 = vmatpush1.msra.mxu0 0.0
    %239 = vmatprep.subr.mxu0 0.0
    %240 = vmatpush1.msra.mxu0 0.0
    %241 = vmatprep.subr.mxu0 0.0
    %242 = vmatpush1.msra.mxu0 0.0
    %243 = vmatprep.subr.mxu0 0.0
    %244 = vmatpush1.msra.mxu0 0.0
    %245 = vmatprep.subr.mxu0 0.0
    %246 = vmatpush1.msra.mxu0 0.0
    %247 = vmatprep.subr.mxu0 0.0
    %248 = vmatpush1.msra.mxu0 0.0
    %249 = vmatprep.subr.mxu0 0.0
    %250 = vmatpush1.msra.mxu0 0.0
    %251 = vmatprep.subr.mxu0 0.0
    %252 = vmatpush1.msra.mxu0 0.0
    %253 = vmatprep.subr.mxu0 0.0
    %254 = vmatpush1.msra.mxu0 0.0
    %255 = vmatprep.subr.mxu0 0.0
    %256 = vmatpush1.msra.mxu0 0.0
    %257 = vmatprep.subr.mxu0 0.0
    %258 = vmatpush1.msra.mxu0 0.0
    %259 = vmatprep.subr.mxu0 0.0
    %260 = vmatpush1.msra.mxu0 0.0
    %261 = vmatprep.subr.mxu0 0.0
    %262 = vmatpush1.msra.mxu0 0.0
    %263 = vmatprep.subr.mxu0 0.0
    %264 = vmatpush1.msra.mxu0 0.0
    %265 = vmatprep.subr.mxu0 0.0
    %266 = vmatpush1.msra.mxu0 0.0
    %267 = vmatprep.subr.mxu0 0.0
    %268 = vmatpush1.msra.mxu0 0.0
    %269 = vmatprep.subr.mxu0 0.0
    %270 = vmatpush1.msra.mxu0 0.0
    %271 = vmatprep.subr.mxu0 0.0
    %272 = vmatpush1.msra.mxu0 0.0
    %273 = vmatprep.subr.mxu0 0.0
    %274 = vmatpush1.msra.mxu0 0.0
    %275 = vmatprep.subr.mxu0 0.0
    %276 = vmatpush1.msra.mxu0 0.0
    %277 = vmatprep.subr.mxu0 0.0
    %278 = vmatpush1.msra.mxu0 0.0
    %279 = vmatprep.subr.mxu0 0.0
    %280 = vmatpush1.msra.mxu0 0.0
    %281 = vmatprep.subr.mxu0 0.0
    %282 = vmatpush1.msra.mxu0 0.0
    %283 = vmatprep.mubr.f32.mxu0 0.0
    %284 = vmatmul.mubr.f32.gmra.mrb[0].mxu0 %v217
    %v285 = vpop.f32.mrb[0].mxu0
    %v286 = vadd.f32 %v214, %v285
    %v287 = vpop.f32.mrb[0].mxu0
    %288 = vdwg.mxu0
    %vm289 = vcmask 31744
    %290 = vst.msk [vmem:[#allocation2] sm:$0xff] %vm289, %v286
    // Predicated region
    $region30: #{tpu_custom_call.1} parent=1 // pred_check
      _
    $region31: #{tpu_custom_call.1} parent=1 // pred_check_branch
      %292 = sbr.rel (0) target = $region33
    $region32: #{tpu_custom_call.1} parent=1 // pred_region
      %s294 = ssub.s32 128, 32
      %295 = vsyncadd [#allocation3], %s294
      %s296 = sshll.u32 [#allocation2], 4
      %s297 = int_to_ptr.vmem [resolvable:$true] %s296
      %302 = dma.vmem_to_hbm [thread:$0]  %s297, 32, %s7, [#allocation3], 32, 32, 2
    $region33: #{tpu_custom_call.1} parent=1 // pred_fallthru
      _
    // Predicated region
    $region34: #{tpu_custom_call.1} parent=1 // pred_check
      _
    $region35: #{tpu_custom_call.1} parent=1 // pred_check_branch
      %304 = sbr.rel (0) target = $region37
    $region36: #{tpu_custom_call.1} parent=1 // pred_region
      %305 = dma.done [#allocation3], 128
    $region37: #{tpu_custom_call.1} parent=1 // pred_fallthru
      _
    %306 = vsyncpa [#allocation3], 1

</llo_original>
